<compile_context>
chip_gen: v7x
topology: tpu7x:2x2x1
jax: 0.10.0
libtpu: 0.0.40
codegen_flags: <defaults>
</compile_context>

<pallas_src>
import jax
import jax.numpy as jnp
from jax.experimental import pallas as pl
from jax.experimental.pallas import tpu as pltpu


LANE_TILE = 256          # lane-dense tile quantum (fills 2x256^2 MXU on v6e/v7x)
MAX_BLOCK_BATCH = 8192   # per-tile batch cap; working set ~1 MiB f32 at H=32


def _round_up(x, m):
    return ((x + m - 1) // m) * m


def _choose_tiling(n):
    """Pick (block_batch, n_tiles) with block_batch a multiple of 256.

    Keeps >=2 grid steps when there is enough work (v7x has 2 TensorCores),
    and caps the tile so the per-step working set stays small.
    """
    if n <= LANE_TILE:
        return LANE_TILE, 1
    n_tiles = max(2, -(-n // MAX_BLOCK_BATCH))            # ceil(n / cap), >= 2
    block = _round_up(-(-n // n_tiles), LANE_TILE)
    block = min(block, MAX_BLOCK_BATCH)
    n_tiles = -(-n // block)
    return block, n_tiles


def _make_mlp_kernel(depth, bar_approach, a, b, c_a, c_b, use_bf16_tanh):
    """Builds the Pallas kernel body for a given static depth / bar config.

    c_a = y_a / (b - a), c_b = y_b / (b - a) are precomputed trace-time floats.
    """

    def kernel(*refs):
        # refs = [x, w_in_t, b_in_t, (w_h_t, b_h_t) * (depth-1),
        #         w_out_row, b_out, o]
        x_ref = refs[0]                        # (1, TB)   lane-dense batch
        w_in_ref, b_in_ref = refs[1], refs[2]  # (H, 1), (H, 1)
        idx = 3
        hidden_refs = []
        for _ in range(depth - 1):
            hidden_refs.append((refs[idx], refs[idx + 1]))  # (H, H), (H, 1)
            idx += 2
        w_out_ref, b_out_ref = refs[idx], refs[idx + 1]      # (1, H), (1, 1)
        o_ref = refs[idx + 2]                                # (1, TB)

        x = x_ref[...].astype(jnp.float32)                   # (1, TB)

        def sigmoid(h):
            # single EUP tanh instead of exp + exact f32 divide
            if use_bf16_tanh:
                # bf16 EUP on v6e/v7x roughly halves transcendental time
                t = jnp.tanh((0.5 * h).astype(jnp.bfloat16)).astype(jnp.float32)
            else:
                t = jnp.tanh(0.5 * h)
            return 0.5 * (t + 1.0)

        # First layer: in_features == 1, so it is a broadcasted outer product
        # (H,1) * (1,TB) -> (H,TB).
        h = w_in_ref[...] * x + b_in_ref[...]                # (H, TB)
        h = sigmoid(h)

        # Hidden layers: (H,H) @ (H,TB) — batch rides the MXU N / lane axis.
        for w_ref, b_ref in hidden_refs:
            h = jnp.dot(w_ref[...], h,
                        preferred_element_type=jnp.float32) + b_ref[...]
            h = sigmoid(h)

        # Output layer on the MXU: (1,H) @ (H,TB) -> (1,TB)
        # (frees VPU/XLU slots vs. an elementwise-mul + sublane reduce).
        y = jnp.dot(w_out_ref[...], h,
                    preferred_element_type=jnp.float32) + b_out_ref[...]

        if bar_approach:
            # dirichlet / dirichlet bar scaling, trace-time constants only;
            # hoist (x-a) and (b-x) so each is computed exactly once.
            xa = x - a
            bx = b - x
            y = xa * bx * y + xa * c_b + bx * c_a

        o_ref[...] = y.astype(o_ref.dtype)                   # lane-dense store

    return kernel


def init_params(key, input_features=1, hidden_units=32, output_features=1,
                depth=1):
    """Deterministic parameter init (PyTorch Linear-like uniform fan-in)."""
    assert input_features == 1 and output_features == 1, \
        "This ODE-solver net uses scalar in/out features."
    keys = jax.random.split(key, 2 * (depth + 1))
    params = {}

    def lin(kw, kb, fan_in, fan_out):
        bound = 1.0 / jnp.sqrt(fan_in)
        w = jax.random.uniform(kw, (fan_in, fan_out), jnp.float32, -bound, bound)
        bias = jax.random.uniform(kb, (1, fan_out), jnp.float32, -bound, bound)
        return w, bias

    params["w_in"], params["b_in"] = lin(keys[0], keys[1], input_features,
                                         hidden_units)          # (1,H), (1,H)
    params["hidden"] = []
    for d in range(depth - 1):
        params["hidden"].append(lin(keys[2 + 2 * d], keys[3 + 2 * d],
                                    hidden_units, hidden_units))  # (H,H), (1,H)
    params["w_out"], params["b_out"] = lin(keys[-2], keys[-1],
                                           hidden_units, output_features)
    # w_out: (H, 1), b_out: (1, 1)
    return params


def neural_network_forward(x, params, *, depth=1, bar_approach=False,
                           domain_ends=(0.0, 1.0), bcs=None,
                           block_batch=None, use_bf16_tanh=False):
    """Runs the MLP (and optional bar scaling) as a single Pallas TPU kernel."""
    n, f = x.shape
    assert f == 1

    # ---- batch tiling: pad to a lane-dense multiple, big tiles, >=2 steps --
    if block_batch is None:
        block_batch, n_tiles = _choose_tiling(n)
    else:
        assert block_batch % LANE_TILE == 0, \
            "block_batch must be a multiple of 256 lanes."
        n_tiles = -(-n // block_batch)
    n_pad = block_batch * n_tiles

    if bar_approach:
        assert bcs is not None
        y_a_type, y_a = bcs["a"]
        y_b_type, y_b = bcs["b"]
        assert y_a_type == "dirichlet" and y_b_type == "dirichlet", \
            "Only dirichlet/dirichlet bar scaling implemented."  # see TODO above
        a, b = float(domain_ends[0]), float(domain_ends[1])
        inv_ba = 1.0 / (b - a)
        c_a = float(y_a) * inv_ba
        c_b = float(y_b) * inv_ba
    else:
        a = b = c_a = c_b = 0.0

    kernel = _make_mlp_kernel(depth, bar_approach, a, b, c_a, c_b,
                              use_bf16_tanh)

    # ---- operands (transposed so H is on sublanes, batch on lanes) ---------
    x_lane = x.reshape(1, n)
    if n_pad != n:
        x_lane = jnp.pad(x_lane, ((0, 0), (0, n_pad - n)))   # zero-pad lanes
    operands = [
        x_lane,                                    # (1, n_pad)
        params["w_in"].T,                          # (H, 1)
        params["b_in"].T,                          # (H, 1)
    ]
    for (wh, bh) in params["hidden"]:
        operands += [wh.T, bh.T]                   # (H, H), (H, 1)
    operands += [params["w_out"].T, params["b_out"]]  # (1, H), (1, 1)

    def full_spec(shape):
        # whole-array block (block == full array dims), constant index map ->
        # weights stay resident in VMEM across all grid steps.
        return pl.BlockSpec(shape, lambda i, _s=shape: tuple(0 for _ in _s))

    in_specs = [pl.BlockSpec((1, block_batch), lambda i: (0, i))]
    in_specs += [full_spec(op.shape) for op in operands[1:]]
    out_spec = pl.BlockSpec((1, block_batch), lambda i: (0, i))

    grid = (n_tiles,)

    y_lane = pl.pallas_call(
        kernel,
        out_shape=jax.ShapeDtypeStruct((1, n_pad), jnp.float32),
        grid=grid,
        in_specs=in_specs,
        out_specs=out_spec,
        compiler_params=pltpu.CompilerParams(
            dimension_semantics=("parallel",)),
    )(*operands)

    return y_lane[0, :n].reshape(n, 1)


# ---------------------------- pure-JAX reference --------------------------- #
def reference_forward(x, params, *, depth=1, bar_approach=False,
                      domain_ends=(0.0, 1.0), bcs=None):
    h = jax.nn.sigmoid(x @ params["w_in"] + params["b_in"])
    for (wh, bh) in params["hidden"]:
        h = jax.nn.sigmoid(h @ wh + bh)
    y = h @ params["w_out"] + params["b_out"]
    if bar_approach:
        a, b = map(float, domain_ends)
        y_a, y_b = float(bcs["a"][1]), float(bcs["b"][1])
        y = ((x - a) * (b - x) * y
             + (x - a) / (b - a) * y_b
             + (b - x) / (b - a) * y_a)
    return y


if __name__ == "__main__":
    key = jax.random.PRNGKey(0)
    k_x1, k_x2, k_p = jax.random.split(key, 3)

    depth = 2
    hidden_units = 32
    domain_ends = (0.0, 2.0)
    bcs = {"a": ("dirichlet", 0.0), "b": ("dirichlet", 1.0)}

    params = init_params(k_p, input_features=1, hidden_units=hidden_units,
                         output_features=1, depth=depth)

    # n1 = 300 exercises the ragged-N padding path (single-ish tile);
    # n2 = 1000 exercises a multi-step grid (2 x 512 tiles, v7x megacore).
    for k_x, n in ((k_x1, 300), (k_x2, 1000)):
        x = jax.random.uniform(k_x, (n, 1), jnp.float32,
                               domain_ends[0], domain_ends[1])

        # plain stack forward (bar_approach=False)
        y_plain = neural_network_forward(x, params, depth=depth,
                                         bar_approach=False)
        jax.block_until_ready(y_plain)

        # bar-approach forward (dirichlet/dirichlet)
        y_bar = neural_network_forward(x, params, depth=depth,
                                       bar_approach=True,
                                       domain_ends=domain_ends, bcs=bcs)
        jax.block_until_ready(y_bar)

        # correctness check vs pure-JAX reference (all-f32 path, tight tol)
        ref_plain = reference_forward(x, params, depth=depth,
                                      bar_approach=False)
        ref_bar = reference_forward(x, params, depth=depth, bar_approach=True,
                                    domain_ends=domain_ends, bcs=bcs)
        assert jnp.allclose(y_plain, ref_plain, atol=1e-5, rtol=1e-5), \
            float(jnp.max(jnp.abs(y_plain - ref_plain)))
        assert jnp.allclose(y_bar, ref_bar, atol=1e-5, rtol=1e-5), \
            float(jnp.max(jnp.abs(y_bar - ref_bar)))

    # Optional bf16-transcendental path (v6e/v7x EUP); looser tolerance.
    # Kept off by default on the assertion path above to preserve 1e-5 accuracy.
    y_bf16 = neural_network_forward(x, params, depth=depth, bar_approach=True,
                                    domain_ends=domain_ends, bcs=bcs,
                                    use_bf16_tanh=True)
    jax.block_until_ready(y_bf16)
    assert jnp.allclose(y_bf16, ref_bar, atol=3e-2, rtol=3e-2), \
        float(jnp.max(jnp.abs(y_bf16 - ref_bar)))

    print("KERNEL_OK")
</pallas_src>

<mosaic_0001>
module attributes {stable_mosaic.version = 11 : i64} {
  func.func @kernel(%arg0: i32, %arg1: memref<1x256xf32, #tpu.memory_space<vmem>>, %arg2: memref<32x1xf32, #tpu.memory_space<vmem>>, %arg3: memref<32x1xf32, #tpu.memory_space<vmem>>, %arg4: memref<32x32xf32, #tpu.memory_space<vmem>>, %arg5: memref<32x1xf32, #tpu.memory_space<vmem>>, %arg6: memref<1x32xf32, #tpu.memory_space<vmem>>, %arg7: memref<1x1xf32, #tpu.memory_space<vmem>>, %arg8: memref<1x256xf32, #tpu.memory_space<vmem>>) attributes {dimension_semantics = [#tpu.dimension_semantics<parallel>], iteration_bounds = array<i64: 2>, scalar_prefetch = 0 : i64, scratch_operands = 0 : i64, tpu.core_type = #tpu.core_type<tc>, window_params = [{transform_indices = @transform_0, window_bounds = array<i64: 1, 256>}, {pipeline_mode = #tpu.pipeline_mode<synchronous>, transform_indices = @transform_1, window_bounds = array<i64: 32, 1>}, {pipeline_mode = #tpu.pipeline_mode<synchronous>, transform_indices = @transform_2, window_bounds = array<i64: 32, 1>}, {pipeline_mode = #tpu.pipeline_mode<synchronous>, transform_indices = @transform_3, window_bounds = array<i64: 32, 32>}, {pipeline_mode = #tpu.pipeline_mode<synchronous>, transform_indices = @transform_4, window_bounds = array<i64: 32, 1>}, {pipeline_mode = #tpu.pipeline_mode<synchronous>, transform_indices = @transform_5, window_bounds = array<i64: 1, 32>}, {pipeline_mode = #tpu.pipeline_mode<synchronous>, transform_indices = @transform_6, window_bounds = array<i64: 1, 1>}, {transform_indices = @transform_7, window_bounds = array<i64: 1, 256>}]} {
    %c0 = arith.constant 0 : index
    %c0_0 = arith.constant 0 : index
    %0 = vector.load %arg1[%c0, %c0_0] : memref<1x256xf32, #tpu.memory_space<vmem>>, vector<1x256xf32>
    %c0_1 = arith.constant 0 : index
    %c0_2 = arith.constant 0 : index
    %1 = vector.load %arg2[%c0_1, %c0_2] : memref<32x1xf32, #tpu.memory_space<vmem>>, vector<32x1xf32>
    %2 = vector.broadcast %1 : vector<32x1xf32> to vector<32x256xf32>
    %3 = vector.broadcast %0 : vector<1x256xf32> to vector<32x256xf32>
    %4 = arith.mulf %2, %3 : vector<32x256xf32>
    %c0_3 = arith.constant 0 : index
    %c0_4 = arith.constant 0 : index
    %5 = vector.load %arg3[%c0_3, %c0_4] : memref<32x1xf32, #tpu.memory_space<vmem>>, vector<32x1xf32>
    %6 = vector.broadcast %5 : vector<32x1xf32> to vector<32x256xf32>
    %7 = arith.addf %4, %6 : vector<32x256xf32>
    %cst = arith.constant 5.000000e-01 : f32
    %8 = vector.broadcast %cst : f32 to vector<32x256xf32>
    %9 = arith.mulf %8, %7 : vector<32x256xf32>
    %10 = math.tanh %9 : vector<32x256xf32>
    %cst_5 = arith.constant 1.000000e+00 : f32
    %11 = vector.broadcast %cst_5 : f32 to vector<32x256xf32>
    %12 = arith.addf %10, %11 : vector<32x256xf32>
    %cst_6 = arith.constant 5.000000e-01 : f32
    %13 = vector.broadcast %cst_6 : f32 to vector<32x256xf32>
    %14 = arith.mulf %13, %12 : vector<32x256xf32>
    %c0_7 = arith.constant 0 : index
    %c0_8 = arith.constant 0 : index
    %15 = vector.load %arg4[%c0_7, %c0_8] : memref<32x32xf32, #tpu.memory_space<vmem>>, vector<32x32xf32>
    %cst_9 = arith.constant dense<0.000000e+00> : vector<32x256xf32>
    %16 = tpu.matmul %15, %14, %cst_9 {dimension_numbers = #tpu.dot_dimension_numbers<[1], [0], [0], [1], [0, 0, 1, 1], [], []>} : vector<32x32xf32>, vector<32x256xf32>, vector<32x256xf32> -> vector<32x256xf32>
    %c0_10 = arith.constant 0 : index
    %c0_11 = arith.constant 0 : index
    %17 = vector.load %arg5[%c0_10, %c0_11] : memref<32x1xf32, #tpu.memory_space<vmem>>, vector<32x1xf32>
    %18 = vector.broadcast %17 : vector<32x1xf32> to vector<32x256xf32>
    %19 = arith.addf %16, %18 : vector<32x256xf32>
    %cst_12 = arith.constant 5.000000e-01 : f32
    %20 = vector.broadcast %cst_12 : f32 to vector<32x256xf32>
    %21 = arith.mulf %20, %19 : vector<32x256xf32>
    %22 = math.tanh %21 : vector<32x256xf32>
    %cst_13 = arith.constant 1.000000e+00 : f32
    %23 = vector.broadcast %cst_13 : f32 to vector<32x256xf32>
    %24 = arith.addf %22, %23 : vector<32x256xf32>
    %cst_14 = arith.constant 5.000000e-01 : f32
    %25 = vector.broadcast %cst_14 : f32 to vector<32x256xf32>
    %26 = arith.mulf %25, %24 : vector<32x256xf32>
    %c0_15 = arith.constant 0 : index
    %c0_16 = arith.constant 0 : index
    %27 = vector.load %arg6[%c0_15, %c0_16] : memref<1x32xf32, #tpu.memory_space<vmem>>, vector<1x32xf32>
    %cst_17 = arith.constant dense<0.000000e+00> : vector<1x256xf32>
    %28 = tpu.matmul %27, %26, %cst_17 {dimension_numbers = #tpu.dot_dimension_numbers<[1], [0], [0], [1], [0, 0, 1, 1], [], []>} : vector<1x32xf32>, vector<32x256xf32>, vector<1x256xf32> -> vector<1x256xf32>
    %c0_18 = arith.constant 0 : index
    %c0_19 = arith.constant 0 : index
    %29 = vector.load %arg7[%c0_18, %c0_19] : memref<1x1xf32, #tpu.memory_space<vmem>>, vector<1x1xf32>
    %30 = vector.broadcast %29 : vector<1x1xf32> to vector<1x256xf32>
    %31 = arith.addf %28, %30 : vector<1x256xf32>
    %c0_20 = arith.constant 0 : index
    %c0_21 = arith.constant 0 : index
    %32 = vector.load %arg8[%c0_20, %c0_21] : memref<1x256xf32, #tpu.memory_space<vmem>>, vector<1x256xf32>
    tpu.vector_store %arg8[%c0_20, %c0_21], %31 {strides = array<i32>} : memref<1x256xf32, #tpu.memory_space<vmem>>, vector<1x256xf32>,
    return
  }
  func.func @transform_0(%arg0: i32) -> (i32, i32) {
    %c0_i32 = arith.constant 0 : i32
    %c0_i32_0 = arith.constant 0 : i32
    return %c0_i32, %arg0 : i32, i32
  }
  func.func @transform_1(%arg0: i32) -> (i32, i32) {
    %c0_i32 = arith.constant 0 : i32
    %c0_i32_0 = arith.constant 0 : i32
    %c0_i32_1 = arith.constant 0 : i32
    return %c0_i32, %c0_i32_0 : i32, i32
  }
  func.func @transform_2(%arg0: i32) -> (i32, i32) {
    %c0_i32 = arith.constant 0 : i32
    %c0_i32_0 = arith.constant 0 : i32
    %c0_i32_1 = arith.constant 0 : i32
    return %c0_i32, %c0_i32_0 : i32, i32
  }
  func.func @transform_3(%arg0: i32) -> (i32, i32) {
    %c0_i32 = arith.constant 0 : i32
    %c0_i32_0 = arith.constant 0 : i32
    %c0_i32_1 = arith.constant 0 : i32
    return %c0_i32, %c0_i32_0 : i32, i32
  }
  func.func @transform_4(%arg0: i32) -> (i32, i32) {
    %c0_i32 = arith.constant 0 : i32
    %c0_i32_0 = arith.constant 0 : i32
    %c0_i32_1 = arith.constant 0 : i32
    return %c0_i32, %c0_i32_0 : i32, i32
  }
  func.func @transform_5(%arg0: i32) -> (i32, i32) {
    %c0_i32 = arith.constant 0 : i32
    %c0_i32_0 = arith.constant 0 : i32
    %c0_i32_1 = arith.constant 0 : i32
    return %c0_i32, %c0_i32_0 : i32, i32
  }
  func.func @transform_6(%arg0: i32) -> (i32, i32) {
    %c0_i32 = arith.constant 0 : i32
    %c0_i32_0 = arith.constant 0 : i32
    %c0_i32_1 = arith.constant 0 : i32
    return %c0_i32, %c0_i32_0 : i32, i32
  }
  func.func @transform_7(%arg0: i32) -> (i32, i32) {
    %c0_i32 = arith.constant 0 : i32
    %c0_i32_0 = arith.constant 0 : i32
    return %c0_i32, %arg0 : i32, i32
  }
}

</mosaic_0001>

<llo_original>
// kernel: tpu_custom_call.1
$region0: #{tpu_custom_call.1}
  #allocation0 [shape = 'u32[]', space=smem, size = 0x4, offset = 0x4, fixed_abs, tag = 'smem constant byte address 0x4 - core index']
  #allocation1 [shape = 'u32[144,128]{1,0:T(1,128)}', space=vmem, size = 0x12000, scoped, tag = 'internal scratch']
  #allocation2 [shape = 'f32[1,1]{1,0:T(1,128)S(1)}', space=vmem, size = 0x200, scoped, tag = 'scoped memory for tpu_custom_call.1']
  %s0 = inlined_call_operand.vmem [shape: f32[1,512], index: 0, kind: input, shape index: {}]
  %s1 = inlined_call_operand.vmem [shape: f32[32,1], index: 1, kind: input, shape index: {}]
  %s2 = inlined_call_operand.vmem [shape: f32[32,1], index: 2, kind: input, shape index: {}]
  %s3 = inlined_call_operand.vmem [shape: f32[32,32], index: 3, kind: input, shape index: {}]
  %s4 = inlined_call_operand.vmem [shape: f32[32,1], index: 4, kind: input, shape index: {}]
  %s5 = inlined_call_operand.vmem [shape: f32[1,32], index: 5, kind: input, shape index: {}]
  %s6 = inlined_call_operand.<no memory space> [shape: f32[1,1], index: 6, kind: input, shape index: {}]
  %s7 = inlined_call_operand.hbm [shape: f32[1,512], index: 7, kind: output, shape index: {}]
  %s8 = sld [smem:[#allocation0]]
  $region61: #{tpu_custom_call.1} parent=0
    _
  %s10 = ssub.s32 1, %s8
  %s11 = scalar_select 0, %s10, %s8
  %v12 = vstv %s6
  %13 = vst [vmem:[#allocation2] sm:$0x1] %v12
  $region1: #{tpu_custom_call.1} parent=0
    #allocation3 [shape = 'u8[2048]{0}', space=vmem, size = 0x800, scoped, tag = 'output window, operand 0']
    #allocation4 [shape = 's32[2]{0}', space=sflag, size = 0x8, scoped, tag = 'scoped memory for tpu_custom_call.1']
    %14 = vsyncpa [#allocation4], 0
    %s15 = scalar_lea.sflag [#allocation4], 1
    %16 = vsyncpa %s15, 0
    loop: start=0, step=1, limit=4
    $region2: #{tpu_custom_call.1} parent=1 // loop_pre_header
      _
    $region3: #{tpu_custom_call.1} parent=1 // loop_header
      %s18 = sphi 0, %s22
      %p19 = scmp.ge.s32.totalorder %s18, 4
      %s28 = sphi 0, %s30
      %s31 = sphi 0, %s28
      %s32 = sphi 0, %s31
      %s48 = sphi 0, %s32
      %s52 = sphi 0, %s52
      %s54 = sphi 0, %s52
      %s55 = sphi 0, %s54
      %s69 = sphi 0, %s55
      %s73 = sphi 0, %s73
      %s75 = sphi 0, %s73
      %s76 = sphi 0, %s75
      %s90 = sphi 0, %s76
      %s94 = sphi 0, %s94
      %s96 = sphi 0, %s94
      %s97 = sphi 0, %s96
      %s111 = sphi 0, %s97
      %s115 = sphi 0, %s115
      %s117 = sphi 0, %s115
      %s118 = sphi 0, %s117
      %s132 = sphi 0, %s118
      %s136 = sphi 0, %s136
      %s138 = sphi 0, %s136
      %s139 = sphi 0, %s138
      %s153 = sphi 0, %s139
      %s157 = sphi 0, %s157
      %s159 = sphi 0, %s157
      %s160 = sphi 0, %s159
      %s174 = sphi 0, %s160
      %s180 = sphi 0, %s182
      %s183 = sphi 0, %s180
      %s184 = sphi 0, %s183
      %s200 = sphi 0, %s184
    $region4: #{tpu_custom_call.1} parent=1 // loop_header_branch
      %21 = sbr.rel (%p19) target = $region8
    $region5: #{tpu_custom_call.1} parent=1 // loop_body
      %s23 = ssub.s32 %s18, 1
      %s24 = ssub.s32 %s18, 2
      %s25 = sadd.s32 %s18, 1
      %s26 = ssub.s32 %s18, %s25
      %p27 = scmp.eq.s32.totalorder %s26, 0
      %s29 = sadd.s32 %s28, 1
      %s30 = scalar_select %p27, %s28, %s29
      %p33 = pneg %p27
      %p34 = scmp.eq.s32.totalorder %s18, 1
      %p35 = por %p33, %p34
      %p36 = scmp.ne.s32.totalorder %s28, %s31
      %p37 = scmp.eq.s32.totalorder %s18, 0
      %p38 = por %p36, %p37
      %p39 = scmp.ne.s32.totalorder %s28, %s31
      %p40 = scmp.eq.s32.totalorder %s23, 1
      %p41 = por %p39, %p40
      %p42 = scmp.ne.s32.totalorder %s31, %s32
      %p43 = scmp.eq.s32.totalorder %s23, 0
      %p44 = por %p42, %p43
      %p45 = scmp.ne.s32.totalorder %s31, %s32
      %p46 = scmp.eq.s32.totalorder %s24, 1
      %p47 = por %p45, %p46
      %p49 = scmp.ne.s32.totalorder %s32, %s48
      %p50 = scmp.eq.s32.totalorder %s24, 0
      %p51 = por %p49, %p50
      %s53 = sadd.s32 %s52, 1
      %p56 = scmp.eq.s32.totalorder %s18, 1
      %p57 = scmp.ne.s32.totalorder %s52, %s54
      %p58 = scmp.eq.s32.totalorder %s18, 0
      %p59 = por %p57, %p58
      %p60 = scmp.ne.s32.totalorder %s52, %s54
      %p61 = scmp.eq.s32.totalorder %s23, 1
      %p62 = por %p60, %p61
      %p63 = scmp.ne.s32.totalorder %s54, %s55
      %p64 = scmp.eq.s32.totalorder %s23, 0
      %p65 = por %p63, %p64
      %p66 = scmp.ne.s32.totalorder %s54, %s55
      %p67 = scmp.eq.s32.totalorder %s24, 1
      %p68 = por %p66, %p67
      %p70 = scmp.ne.s32.totalorder %s55, %s69
      %p71 = scmp.eq.s32.totalorder %s24, 0
      %p72 = por %p70, %p71
      %s74 = sadd.s32 %s73, 1
      %p77 = scmp.eq.s32.totalorder %s18, 1
      %p78 = scmp.ne.s32.totalorder %s73, %s75
      %p79 = scmp.eq.s32.totalorder %s18, 0
      %p80 = por %p78, %p79
      %p81 = scmp.ne.s32.totalorder %s73, %s75
      %p82 = scmp.eq.s32.totalorder %s23, 1
      %p83 = por %p81, %p82
      %p84 = scmp.ne.s32.totalorder %s75, %s76
      %p85 = scmp.eq.s32.totalorder %s23, 0
      %p86 = por %p84, %p85
      %p87 = scmp.ne.s32.totalorder %s75, %s76
      %p88 = scmp.eq.s32.totalorder %s24, 1
      %p89 = por %p87, %p88
      %p91 = scmp.ne.s32.totalorder %s76, %s90
      %p92 = scmp.eq.s32.totalorder %s24, 0
      %p93 = por %p91, %p92
      %s95 = sadd.s32 %s94, 1
      %p98 = scmp.eq.s32.totalorder %s18, 1
      %p99 = scmp.ne.s32.totalorder %s94, %s96
      %p100 = scmp.eq.s32.totalorder %s18, 0
      %p101 = por %p99, %p100
      %p102 = scmp.ne.s32.totalorder %s94, %s96
      %p103 = scmp.eq.s32.totalorder %s23, 1
      %p104 = por %p102, %p103
      %p105 = scmp.ne.s32.totalorder %s96, %s97
      %p106 = scmp.eq.s32.totalorder %s23, 0
      %p107 = por %p105, %p106
      %p108 = scmp.ne.s32.totalorder %s96, %s97
      %p109 = scmp.eq.s32.totalorder %s24, 1
      %p110 = por %p108, %p109
      %p112 = scmp.ne.s32.totalorder %s97, %s111
      %p113 = scmp.eq.s32.totalorder %s24, 0
      %p114 = por %p112, %p113
      %s116 = sadd.s32 %s115, 1
      %p119 = scmp.eq.s32.totalorder %s18, 1
      %p120 = scmp.ne.s32.totalorder %s115, %s117
      %p121 = scmp.eq.s32.totalorder %s18, 0
      %p122 = por %p120, %p121
      %p123 = scmp.ne.s32.totalorder %s115, %s117
      %p124 = scmp.eq.s32.totalorder %s23, 1
      %p125 = por %p123, %p124
      %p126 = scmp.ne.s32.totalorder %s117, %s118
      %p127 = scmp.eq.s32.totalorder %s23, 0
      %p128 = por %p126, %p127
      %p129 = scmp.ne.s32.totalorder %s117, %s118
      %p130 = scmp.eq.s32.totalorder %s24, 1
      %p131 = por %p129, %p130
      %p133 = scmp.ne.s32.totalorder %s118, %s132
      %p134 = scmp.eq.s32.totalorder %s24, 0
      %p135 = por %p133, %p134
      %s137 = sadd.s32 %s136, 1
      %p140 = scmp.eq.s32.totalorder %s18, 1
      %p141 = scmp.ne.s32.totalorder %s136, %s138
      %p142 = scmp.eq.s32.totalorder %s18, 0
      %p143 = por %p141, %p142
      %p144 = scmp.ne.s32.totalorder %s136, %s138
      %p145 = scmp.eq.s32.totalorder %s23, 1
      %p146 = por %p144, %p145
      %p147 = scmp.ne.s32.totalorder %s138, %s139
      %p148 = scmp.eq.s32.totalorder %s23, 0
      %p149 = por %p147, %p148
      %p150 = scmp.ne.s32.totalorder %s138, %s139
      %p151 = scmp.eq.s32.totalorder %s24, 1
      %p152 = por %p150, %p151
      %p154 = scmp.ne.s32.totalorder %s139, %s153
      %p155 = scmp.eq.s32.totalorder %s24, 0
      %p156 = por %p154, %p155
      %s158 = sadd.s32 %s157, 1
      %p161 = scmp.eq.s32.totalorder %s18, 1
      %p162 = scmp.ne.s32.totalorder %s157, %s159
      %p163 = scmp.eq.s32.totalorder %s18, 0
      %p164 = por %p162, %p163
      %p165 = scmp.ne.s32.totalorder %s157, %s159
      %p166 = scmp.eq.s32.totalorder %s23, 1
      %p167 = por %p165, %p166
      %p168 = scmp.ne.s32.totalorder %s159, %s160
      %p169 = scmp.eq.s32.totalorder %s23, 0
      %p170 = por %p168, %p169
      %p171 = scmp.ne.s32.totalorder %s159, %s160
      %p172 = scmp.eq.s32.totalorder %s24, 1
      %p173 = por %p171, %p172
      %p175 = scmp.ne.s32.totalorder %s160, %s174
      %p176 = scmp.eq.s32.totalorder %s24, 0
      %p177 = por %p175, %p176
      %s178 = ssub.s32 %s18, %s25
      %p179 = scmp.eq.s32.totalorder %s178, 0
      %s181 = sadd.s32 %s180, 1
      %s182 = scalar_select %p179, %s180, %s181
      %p185 = pneg %p179
      %p186 = scmp.eq.s32.totalorder %s18, 1
      %p187 = por %p185, %p186
      %p188 = scmp.ne.s32.totalorder %s180, %s183
      %p189 = scmp.eq.s32.totalorder %s18, 0
      %p190 = por %p188, %p189
      %p191 = scmp.ne.s32.totalorder %s180, %s183
      %p192 = scmp.eq.s32.totalorder %s23, 1
      %p193 = por %p191, %p192
      %p194 = scmp.ne.s32.totalorder %s183, %s184
      %p195 = scmp.eq.s32.totalorder %s23, 0
      %p196 = por %p194, %p195
      %p197 = scmp.ne.s32.totalorder %s183, %s184
      %p198 = scmp.eq.s32.totalorder %s24, 1
      %p199 = por %p197, %p198
      %p201 = scmp.ne.s32.totalorder %s184, %s200
      %p202 = scmp.eq.s32.totalorder %s24, 0
      %p203 = por %p201, %p202
      %p204 = scmp.le.s32.totalorder 1, %s18
      %p205 = scmp.lt.s32.totalorder %s18, 3
      %p206 = pnand %p204, %p205
      %p207 = pneg %p206
      // Predicated region
      $region9: #{tpu_custom_call.1} parent=5 // pred_check
        _
      $region10: #{tpu_custom_call.1} parent=5 // pred_check_branch
        %209 = sbr.rel (%p206) target = $region12
      $region11: #{tpu_custom_call.1} parent=5 // pred_region
        %s210 = ssub.s32 %s18, 1
        // Predicated region
        $region13: #{tpu_custom_call.1} parent=11 // pred_check
          %p211 = pneg %p65
        $region14: #{tpu_custom_call.1} parent=11 // pred_check_branch
          %213 = sbr.rel (%p211) target = $region16
        $region15: #{tpu_custom_call.1} parent=11 // pred_region
          _
        $region16: #{tpu_custom_call.1} parent=11 // pred_fallthru
          _
        // Predicated region
        $region17: #{tpu_custom_call.1} parent=11 // pred_check
          %p214 = pneg %p86
        $region18: #{tpu_custom_call.1} parent=11 // pred_check_branch
          %216 = sbr.rel (%p214) target = $region20
        $region19: #{tpu_custom_call.1} parent=11 // pred_region
          _
        $region20: #{tpu_custom_call.1} parent=11 // pred_fallthru
          _
        // Predicated region
        $region21: #{tpu_custom_call.1} parent=11 // pred_check
          %p217 = pneg %p107
        $region22: #{tpu_custom_call.1} parent=11 // pred_check_branch
          %219 = sbr.rel (%p217) target = $region24
        $region23: #{tpu_custom_call.1} parent=11 // pred_region
          _
        $region24: #{tpu_custom_call.1} parent=11 // pred_fallthru
          _
        // Predicated region
        $region25: #{tpu_custom_call.1} parent=11 // pred_check
          %p220 = pneg %p128
        $region26: #{tpu_custom_call.1} parent=11 // pred_check_branch
          %222 = sbr.rel (%p220) target = $region28
        $region27: #{tpu_custom_call.1} parent=11 // pred_region
          _
        $region28: #{tpu_custom_call.1} parent=11 // pred_fallthru
          _
        // Predicated region
        $region29: #{tpu_custom_call.1} parent=11 // pred_check
          %p223 = pneg %p149
        $region30: #{tpu_custom_call.1} parent=11 // pred_check_branch
          %225 = sbr.rel (%p223) target = $region32
        $region31: #{tpu_custom_call.1} parent=11 // pred_region
          _
        $region32: #{tpu_custom_call.1} parent=11 // pred_fallthru
          _
        // Predicated region
        $region33: #{tpu_custom_call.1} parent=11 // pred_check
          %p226 = pneg %p170
        $region34: #{tpu_custom_call.1} parent=11 // pred_check_branch
          %228 = sbr.rel (%p226) target = $region36
        $region35: #{tpu_custom_call.1} parent=11 // pred_region
          _
        $region36: #{tpu_custom_call.1} parent=11 // pred_fallthru
          _
      $region12: #{tpu_custom_call.1} parent=5 // pred_fallthru
        _
      %p229 = scmp.lt.s32.totalorder %s18, 2
      // Predicated region
      $region37: #{tpu_custom_call.1} parent=5 // pred_check
        %p230 = pneg %p229
      $region38: #{tpu_custom_call.1} parent=5 // pred_check_branch
        %232 = sbr.rel (%p230) target = $region40
      $region39: #{tpu_custom_call.1} parent=5 // pred_region
        // Predicated region
        $region41: #{tpu_custom_call.1} parent=39 // pred_check
          %p233 = pneg %p38
        $region42: #{tpu_custom_call.1} parent=39 // pred_check_branch
          %235 = sbr.rel (%p233) target = $region44
        $region43: #{tpu_custom_call.1} parent=39 // pred_region
          %s236 = smul.u32 2, %s18
          %p237 = scmp.lt.s32.totalorder %s236, 3
          %s238 = scalar_select %p237, %s236, 3
          %s239 = scalar_lea.vmem %s0, %s238
          %s240 = smul.u32 2, %s18
        $region44: #{tpu_custom_call.1} parent=39 // pred_fallthru
          _
      $region40: #{tpu_custom_call.1} parent=5 // pred_fallthru
        _
      %p241 = scmp.le.s32.totalorder 1, %s18
      %p242 = scmp.lt.s32.totalorder %s18, 3
      %p243 = pnand %p241, %p242
      %p244 = pneg %p243
      // Predicated region
      $region45: #{tpu_custom_call.1} parent=5 // pred_check
        _
      $region46: #{tpu_custom_call.1} parent=5 // pred_check_branch
        %246 = sbr.rel (%p243) target = $region48
      $region47: #{tpu_custom_call.1} parent=5 // pred_region
        %s247 = ssub.s32 %s18, 1
        %s248 = smul.u32 2, %s23
        %p249 = scmp.lt.s32.totalorder %s248, 3
        %s250 = scalar_select %p249, %s248, 3
        %s251 = scalar_lea.vmem %s0, %s250
        %p252 = pneg %p44
        %p253 = pneg %p41
        %p254 = pneg %p65
        %p255 = pneg %p62
        %p256 = pneg %p86
        %p257 = pneg %p83
        %p258 = pneg %p107
        %p259 = pneg %p104
        %p260 = pneg %p128
        %p261 = pneg %p125
        %p262 = pneg %p149
        %p263 = pneg %p146
        %p264 = pneg %p170
        %p265 = pneg %p167
        %p266 = pneg %p196
        %p267 = pneg %p193
        %s268 = sand.u32 %s183, 1
        %s269 = scalar_lea.sflag [#allocation4], %s268
        %s270 = sand.u32 %s183, 1
        %s271 = smul.addr %s270, 2
        %s272 = scalar_lea.vmem [#allocation3], %s271
        %s273 = smul.u32 2, %s23
        %p274 = scmp.lt.s32.totalorder %s273, 3
        %s275 = scalar_select %p274, %s273, 3
        %s276 = scalar_lea.vmem %s0, %s275
        %s277 = smul.u32 2, %s23
        %s278 = smul.u32 2, %s23
        %v279 = vld [vmem:[%s276] sm:$0x3]
        %v280 = vld [vmem:[%s1] sm:$0xff]
        %v281 = vld [vmem:[%s1 + $0x8] sm:$0xff]
        %v282 = vld [vmem:[%s1 + $0x10] sm:$0xff]
        %v283 = vld [vmem:[%s1 + $0x18] sm:$0xff]
        %285 = vset.pattern.permute.xlu0 0
        %286 = vperm.xlu0 %285, %v280
        %v287 = vpop.permute.xlu0 %286
        %290 = vset.pattern.permute.xlu0 0
        %291 = vperm.xlu0 %290, %v281
        %v292 = vpop.permute.xlu0 %291
        %295 = vset.pattern.permute.xlu0 0
        %296 = vperm.xlu0 %295, %v282
        %v297 = vpop.permute.xlu0 %296
        %300 = vset.pattern.permute.xlu0 0
        %301 = vperm.xlu0 %300, %v283
        %v302 = vpop.permute.xlu0 %301
        %v305 = vlaneseq
        %v306 = vshrl.u32 %v305, 7
        %v307 = vsub.s32 0, %v306
        %v308 = vrot.slane %v279, %v307
        %v309 = vlaneseq
        %v310 = vshrl.u32 %v309, 7
        %v311 = vsub.s32 1, %v310
        %v312 = vrot.slane %v279, %v311
        %v315 = vmul.f32 %v287, %v308
        %v316 = vmul.f32 %v287, %v312
        %v317 = vmul.f32 %v292, %v308
        %v318 = vmul.f32 %v292, %v312
        %v319 = vmul.f32 %v297, %v308
        %v320 = vmul.f32 %v297, %v312
        %v321 = vmul.f32 %v302, %v308
        %v322 = vmul.f32 %v302, %v312
        %v323 = vld [vmem:[%s2] sm:$0xff]
        %v324 = vld [vmem:[%s2 + $0x8] sm:$0xff]
        %v325 = vld [vmem:[%s2 + $0x10] sm:$0xff]
        %v326 = vld [vmem:[%s2 + $0x18] sm:$0xff]
        %328 = vset.pattern.permute.xlu0 0
        %329 = vperm.xlu0 %328, %v323
        %v330 = vpop.permute.xlu0 %329
        %333 = vset.pattern.permute.xlu0 0
        %334 = vperm.xlu0 %333, %v324
        %v335 = vpop.permute.xlu0 %334
        %338 = vset.pattern.permute.xlu0 0
        %339 = vperm.xlu0 %338, %v325
        %v340 = vpop.permute.xlu0 %339
        %343 = vset.pattern.permute.xlu0 0
        %344 = vperm.xlu0 %343, %v326
        %v345 = vpop.permute.xlu0 %344
        %v347 = vadd.f32 %v315, %v330
        %v348 = vadd.f32 %v316, %v330
        %v349 = vadd.f32 %v317, %v335
        %v350 = vadd.f32 %v318, %v335
        %v351 = vadd.f32 %v319, %v340
        %v352 = vadd.f32 %v320, %v340
        %v353 = vadd.f32 %v321, %v345
        %v354 = vadd.f32 %v322, %v345
        %v355 = vmul.f32 %v347, 0.5
        %v356 = vmul.f32 %v348, 0.5
        %v357 = vmul.f32 %v349, 0.5
        %v358 = vmul.f32 %v350, 0.5
        %v359 = vmul.f32 %v351, 0.5
        %v360 = vmul.f32 %v352, 0.5
        %v361 = vmul.f32 %v353, 0.5
        %v362 = vmul.f32 %v354, 0.5
        %v363 = vtanh.pop %v355
        %v364 = vtanh.pop %v356
        %v365 = vtanh.pop %v357
        %v366 = vtanh.pop %v358
        %v367 = vtanh.pop %v359
        %v368 = vtanh.pop %v360
        %v369 = vtanh.pop %v361
        %v370 = vtanh.pop %v362
        %v371 = vadd.f32 %v363, 1.0
        %v372 = vadd.f32 %v364, 1.0
        %v373 = vadd.f32 %v365, 1.0
        %v374 = vadd.f32 %v366, 1.0
        %v375 = vadd.f32 %v367, 1.0
        %v376 = vadd.f32 %v368, 1.0
        %v377 = vadd.f32 %v369, 1.0
        %v378 = vadd.f32 %v370, 1.0
        %v379 = vmul.f32 %v371, 0.5
        %v380 = vmul.f32 %v372, 0.5
        %v381 = vmul.f32 %v373, 0.5
        %v382 = vmul.f32 %v374, 0.5
        %v383 = vmul.f32 %v375, 0.5
        %v384 = vmul.f32 %v376, 0.5
        %v385 = vmul.f32 %v377, 0.5
        %v386 = vmul.f32 %v378, 0.5
        %v387 = vld [vmem:[%s3] sm:$0xff]
        %v388 = vld [vmem:[%s3 + $0x8] sm:$0xff]
        %v389 = vld [vmem:[%s3 + $0x10] sm:$0xff]
        %v390 = vld [vmem:[%s3 + $0x18] sm:$0xff]
        %v391 = vld [vmem:[%s4] sm:$0xff]
        %v392 = vld [vmem:[%s4 + $0x8] sm:$0xff]
        %v393 = vld [vmem:[%s4 + $0x10] sm:$0xff]
        %v394 = vld [vmem:[%s4 + $0x18] sm:$0xff]
        %396 = vset.pattern.permute.xlu0 0
        %397 = vperm.xlu0 %396, %v391
        %v398 = vpop.permute.xlu0 %397
        %401 = vset.pattern.permute.xlu0 0
        %402 = vperm.xlu0 %401, %v392
        %v403 = vpop.permute.xlu0 %402
        %406 = vset.pattern.permute.xlu0 0
        %407 = vperm.xlu0 %406, %v393
        %v408 = vpop.permute.xlu0 %407
        %411 = vset.pattern.permute.xlu0 0
        %412 = vperm.xlu0 %411, %v394
        %v413 = vpop.permute.xlu0 %412
        %vm415 = vcmask 261120
        %v417 = vsel %vm415, %v387, 0
        %v420 = vsel %vm415, %v388, 0
        %v423 = vsel %vm415, %v389, 0
        %v426 = vsel %vm415, %v390, 0
        %428 = vmatprep.subr.mxu0 %v380
        %429 = vmatpush1.msra.mxu0 %v379
        %430 = vmatprep.subr.mxu0 %v382
        %431 = vmatpush1.msra.mxu0 %v381
        %432 = vmatprep.subr.mxu0 %v384
        %433 = vmatpush1.msra.mxu0 %v383
        %434 = vmatprep.subr.mxu0 %v386
        %435 = vmatpush1.msra.mxu0 %v385
        %436 = vmatprep.subr.mxu0 0.0
        %437 = vmatpush1.msra.mxu0 0.0
        %438 = vmatprep.subr.mxu0 0.0
        %439 = vmatpush1.msra.mxu0 0.0
        %440 = vmatprep.subr.mxu0 0.0
        %441 = vmatpush1.msra.mxu0 0.0
        %442 = vmatprep.subr.mxu0 0.0
        %443 = vmatpush1.msra.mxu0 0.0
        %444 = vmatprep.subr.mxu0 0.0
        %445 = vmatpush1.msra.mxu0 0.0
        %446 = vmatprep.subr.mxu0 0.0
        %447 = vmatpush1.msra.mxu0 0.0
        %448 = vmatprep.subr.mxu0 0.0
        %449 = vmatpush1.msra.mxu0 0.0
        %450 = vmatprep.subr.mxu0 0.0
        %451 = vmatpush1.msra.mxu0 0.0
        %452 = vmatprep.subr.mxu0 0.0
        %453 = vmatpush1.msra.mxu0 0.0
        %454 = vmatprep.subr.mxu0 0.0
        %455 = vmatpush1.msra.mxu0 0.0
        %456 = vmatprep.subr.mxu0 0.0
        %457 = vmatpush1.msra.mxu0 0.0
        %458 = vmatprep.subr.mxu0 0.0
        %459 = vmatpush1.msra.mxu0 0.0
        %460 = vmatprep.subr.mxu0 0.0
        %461 = vmatpush1.msra.mxu0 0.0
        %462 = vmatprep.subr.mxu0 0.0
        %463 = vmatpush1.msra.mxu0 0.0
        %464 = vmatprep.subr.mxu0 0.0
        %465 = vmatpush1.msra.mxu0 0.0
        %466 = vmatprep.subr.mxu0 0.0
        %467 = vmatpush1.msra.mxu0 0.0
        %468 = vmatprep.subr.mxu0 0.0
        %469 = vmatpush1.msra.mxu0 0.0
        %470 = vmatprep.subr.mxu0 0.0
        %471 = vmatpush1.msra.mxu0 0.0
        %472 = vmatprep.subr.mxu0 0.0
        %473 = vmatpush1.msra.mxu0 0.0
        %474 = vmatprep.subr.mxu0 0.0
        %475 = vmatpush1.msra.mxu0 0.0
        %476 = vmatprep.subr.mxu0 0.0
        %477 = vmatpush1.msra.mxu0 0.0
        %478 = vmatprep.subr.mxu0 0.0
        %479 = vmatpush1.msra.mxu0 0.0
        %480 = vmatprep.subr.mxu0 0.0
        %481 = vmatpush1.msra.mxu0 0.0
        %482 = vmatprep.subr.mxu0 0.0
        %483 = vmatpush1.msra.mxu0 0.0
        %484 = vmatprep.subr.mxu0 0.0
        %485 = vmatpush1.msra.mxu0 0.0
        %486 = vmatprep.subr.mxu0 0.0
        %487 = vmatpush1.msra.mxu0 0.0
        %488 = vmatprep.subr.mxu0 0.0
        %489 = vmatpush1.msra.mxu0 0.0
        %490 = vmatprep.subr.mxu0 0.0
        %491 = vmatpush1.msra.mxu0 0.0
        %492 = vmatprep.mubr.f32.mxu0 0.0
        %493 = vmatmul.mubr.f32.gmra.mrb[0].mxu0 %v417
        %v494 = vpop.f32.mrb[0].mxu0
        %v495 = vadd.f32 %v398, %v494
        %v496 = vpop.f32.mrb[0].mxu0
        %v497 = vadd.f32 %v398, %v496
        %498 = vmatprep.mubr.f32.mxu0 0.0
        %499 = vmatmul.mubr.f32.gmra.mrb[0].mxu0 %v420
        %v500 = vpop.f32.mrb[0].mxu0
        %v501 = vadd.f32 %v403, %v500
        %v502 = vpop.f32.mrb[0].mxu0
        %v503 = vadd.f32 %v403, %v502
        %504 = vmatprep.mubr.f32.mxu0 0.0
        %505 = vmatmul.mubr.f32.gmra.mrb[0].mxu0 %v423
        %v506 = vpop.f32.mrb[0].mxu0
        %v507 = vadd.f32 %v408, %v506
        %v508 = vpop.f32.mrb[0].mxu0
        %v509 = vadd.f32 %v408, %v508
        %510 = vmatprep.mubr.f32.mxu0 0.0
        %511 = vmatmul.mubr.f32.gmra.mrb[0].mxu0 %v426
        %v512 = vpop.f32.mrb[0].mxu0
        %v513 = vadd.f32 %v413, %v512
        %v514 = vpop.f32.mrb[0].mxu0
        %v515 = vadd.f32 %v413, %v514
        %516 = vdwg.mxu0
        %v517 = vmul.f32 %v495, 0.5
        %v518 = vmul.f32 %v497, 0.5
        %v519 = vmul.f32 %v501, 0.5
        %v520 = vmul.f32 %v503, 0.5
        %v521 = vmul.f32 %v507, 0.5
        %v522 = vmul.f32 %v509, 0.5
        %v523 = vmul.f32 %v513, 0.5
        %v524 = vmul.f32 %v515, 0.5
        %v525 = vtanh.pop %v517
        %v526 = vtanh.pop %v518
        %v527 = vtanh.pop %v519
        %v528 = vtanh.pop %v520
        %v529 = vtanh.pop %v521
        %v530 = vtanh.pop %v522
        %v531 = vtanh.pop %v523
        %v532 = vtanh.pop %v524
        %v533 = vadd.f32 %v525, 1.0
        %v534 = vadd.f32 %v526, 1.0
        %v535 = vadd.f32 %v527, 1.0
        %v536 = vadd.f32 %v528, 1.0
        %v537 = vadd.f32 %v529, 1.0
        %v538 = vadd.f32 %v530, 1.0
        %v539 = vadd.f32 %v531, 1.0
        %v540 = vadd.f32 %v532, 1.0
        %v541 = vmul.f32 %v533, 0.5
        %v542 = vmul.f32 %v534, 0.5
        %v543 = vmul.f32 %v535, 0.5
        %v544 = vmul.f32 %v536, 0.5
        %v545 = vmul.f32 %v537, 0.5
        %v546 = vmul.f32 %v538, 0.5
        %v547 = vmul.f32 %v539, 0.5
        %v548 = vmul.f32 %v540, 0.5
        %v549 = vld [vmem:[%s5] sm:$0x1]
        %v550 = vld [vmem:[#allocation2] sm:$0x1]
        %552 = vset.pattern.permute.xlu0 0
        %553 = vperm.xlu0 %552, %v550
        %v554 = vpop.permute.xlu0 %553
        %v556 = vlaneseq
        %v557 = vshrl.u32 %v556, 7
        %v558 = vsub.s32 0, %v557
        %v559 = vrot.slane %v554, %v558
        %v561 = vsel %vm415, %v549, 0
        %563 = vmatprep.subr.mxu0 %v542
        %564 = vmatpush1.msra.mxu0 %v541
        %565 = vmatprep.subr.mxu0 %v544
        %566 = vmatpush1.msra.mxu0 %v543
        %567 = vmatprep.subr.mxu0 %v546
        %568 = vmatpush1.msra.mxu0 %v545
        %569 = vmatprep.subr.mxu0 %v548
        %570 = vmatpush1.msra.mxu0 %v547
        %571 = vmatprep.subr.mxu0 0.0
        %572 = vmatpush1.msra.mxu0 0.0
        %573 = vmatprep.subr.mxu0 0.0
        %574 = vmatpush1.msra.mxu0 0.0
        %575 = vmatprep.subr.mxu0 0.0
        %576 = vmatpush1.msra.mxu0 0.0
        %577 = vmatprep.subr.mxu0 0.0
        %578 = vmatpush1.msra.mxu0 0.0
        %579 = vmatprep.subr.mxu0 0.0
        %580 = vmatpush1.msra.mxu0 0.0
        %581 = vmatprep.subr.mxu0 0.0
        %582 = vmatpush1.msra.mxu0 0.0
        %583 = vmatprep.subr.mxu0 0.0
        %584 = vmatpush1.msra.mxu0 0.0
        %585 = vmatprep.subr.mxu0 0.0
        %586 = vmatpush1.msra.mxu0 0.0
        %587 = vmatprep.subr.mxu0 0.0
        %588 = vmatpush1.msra.mxu0 0.0
        %589 = vmatprep.subr.mxu0 0.0
        %590 = vmatpush1.msra.mxu0 0.0
        %591 = vmatprep.subr.mxu0 0.0
        %592 = vmatpush1.msra.mxu0 0.0
        %593 = vmatprep.subr.mxu0 0.0
        %594 = vmatpush1.msra.mxu0 0.0
        %595 = vmatprep.subr.mxu0 0.0
        %596 = vmatpush1.msra.mxu0 0.0
        %597 = vmatprep.subr.mxu0 0.0
        %598 = vmatpush1.msra.mxu0 0.0
        %599 = vmatprep.subr.mxu0 0.0
        %600 = vmatpush1.msra.mxu0 0.0
        %601 = vmatprep.subr.mxu0 0.0
        %602 = vmatpush1.msra.mxu0 0.0
        %603 = vmatprep.subr.mxu0 0.0
        %604 = vmatpush1.msra.mxu0 0.0
        %605 = vmatprep.subr.mxu0 0.0
        %606 = vmatpush1.msra.mxu0 0.0
        %607 = vmatprep.subr.mxu0 0.0
        %608 = vmatpush1.msra.mxu0 0.0
        %609 = vmatprep.subr.mxu0 0.0
        %610 = vmatpush1.msra.mxu0 0.0
        %611 = vmatprep.subr.mxu0 0.0
        %612 = vmatpush1.msra.mxu0 0.0
        %613 = vmatprep.subr.mxu0 0.0
        %614 = vmatpush1.msra.mxu0 0.0
        %615 = vmatprep.subr.mxu0 0.0
        %616 = vmatpush1.msra.mxu0 0.0
        %617 = vmatprep.subr.mxu0 0.0
        %618 = vmatpush1.msra.mxu0 0.0
        %619 = vmatprep.subr.mxu0 0.0
        %620 = vmatpush1.msra.mxu0 0.0
        %621 = vmatprep.subr.mxu0 0.0
        %622 = vmatpush1.msra.mxu0 0.0
        %623 = vmatprep.subr.mxu0 0.0
        %624 = vmatpush1.msra.mxu0 0.0
        %625 = vmatprep.subr.mxu0 0.0
        %626 = vmatpush1.msra.mxu0 0.0
        %627 = vmatprep.mubr.f32.mxu0 0.0
        %628 = vmatmul.mubr.f32.gmra.mrb[0].mxu0 %v561
        %v629 = vpop.f32.mrb[0].mxu0
        %v630 = vadd.f32 %v559, %v629
        %v631 = vpop.f32.mrb[0].mxu0
        %v632 = vadd.f32 %v559, %v631
        %633 = vdwg.mxu0
        %v636 = vcombine.low %v630, %v632
        %v638 = vunpack.c.l.s4 1966171168
        %v639 = vunpack.c.0.s8 %v638
        %v640 = vlaneseq
        %v641 = vshrl.u32 %v640, 7
        %v642 = vsub.s32 %v639, %v641
        %v643 = vrot.slane %v636, %v642
        %v645 = vunpack.c.l.s4 1966171168
        %v646 = vunpack.c.0.s8 %v645
        %v647 = vlaneseq
        %v648 = vshrl.u32 %v647, 7
        %v649 = vsub.s32 %v646, %v648
        %v650 = vrot.slane %v643, %v649
        %v652 = vlaneseq
        %vm653 = vcmp.ge.s32.totalorder %v652, 0
        %vm654 = vcmp.lt.s32.totalorder %v652, 256
        %vm655 = vmand %vm653, %vm654
        %656 = vst.msk [vmem:[%s272] sm:$0x3] %vm655, %v650
        %s657 = sand.u32 %s183, 1
        %s658 = scalar_lea.sflag [#allocation4], %s657
        %s659 = sand.u32 %s183, 1
        %s660 = smul.addr %s659, 2
        %s661 = scalar_lea.vmem [#allocation3], %s660
        // Predicated region
        $region49: #{tpu_custom_call.1} parent=47 // pred_check
          %p662 = pneg %p193
        $region50: #{tpu_custom_call.1} parent=47 // pred_check_branch
          %664 = sbr.rel (%p662) target = $region52
        $region51: #{tpu_custom_call.1} parent=47 // pred_region
          %s665 = smul.u32 2, %s23
          %s667 = ssub.s32 32, 32
          %668 = vsyncadd %s658, %s667
          %s669 = smul.addr %s665, 16
          %s670 = scalar_lea.hbm %s7, %s669
          %s672 = sshll.u32 %s661, 4
          %s673 = int_to_ptr.vmem [resolvable:$true] %s672
          %675 = dma.vmem_to_hbm [thread:$0]  %s673, 32, %s670, %s658
        $region52: #{tpu_custom_call.1} parent=47 // pred_fallthru
          _
      $region48: #{tpu_custom_call.1} parent=5 // pred_fallthru
        _
      %p676 = scmp.le.s32.totalorder 2, %s18
      // Predicated region
      $region53: #{tpu_custom_call.1} parent=5 // pred_check
        %p677 = pneg %p676
      $region54: #{tpu_custom_call.1} parent=5 // pred_check_branch
        %679 = sbr.rel (%p677) target = $region56
      $region55: #{tpu_custom_call.1} parent=5 // pred_region
        %s680 = ssub.s32 %s18, 2
        // Predicated region
        $region57: #{tpu_custom_call.1} parent=55 // pred_check
          %p681 = pneg %p199
        $region58: #{tpu_custom_call.1} parent=55 // pred_check_branch
          %683 = sbr.rel (%p681) target = $region60
        $region59: #{tpu_custom_call.1} parent=55 // pred_region
          %s684 = sand.u32 %s184, 1
          %s685 = scalar_lea.sflag [#allocation4], %s684
          %s686 = sand.u32 %s184, 1
          %s687 = smul.addr %s686, 2
          %s688 = scalar_lea.vmem [#allocation3], %s687
          %689 = dma.done %s685, 32
        $region60: #{tpu_custom_call.1} parent=55 // pred_fallthru
          _
      $region56: #{tpu_custom_call.1} parent=5 // pred_fallthru
        _
    $region6: #{tpu_custom_call.1} parent=1 // loop_footer
      %s22 = sadd.s32 1, %s18
    $region7: #{tpu_custom_call.1} parent=1 // loop_footer_branch
      %17 = sbr.rel target = $region3
    $region8: #{tpu_custom_call.1} parent=1 // loop_exit
      _
    %690 = vsyncpa [#allocation4], 1
    %s691 = scalar_lea.sflag [#allocation4], 1
    %692 = vsyncpa %s691, 1

</llo_original>
